<compile_context>
chip_gen: v7x
topology: tpu7x:2x2x1
jax: 0.10.0
libtpu: 0.0.40
codegen_flags: <defaults>
</compile_context>

<pallas_src>
import jax
import jax.numpy as jnp
from jax import lax
from jax.experimental import pallas as pl
from jax.experimental.pallas import tpu as pltpu


# -----------------------------------------------------------------------------
# Pallas kernel: tanh(W_eff^T @ x^T + b_eff^T) for both heads at once.
# slab layout (2, 32) f32:
#   cols 0..29 : effective weights transposed (2, 30)
#   col  30    : effective biases (2, 1)
#   col  31    : zero padding
# Output block is lane-dense: (2, TB).
# -----------------------------------------------------------------------------
def _fused_heads_kernel(x_ref, slab_ref, out_ref):
    x = x_ref[...]                    # (TB, 30) f32
    w = slab_ref[:, 0:30]             # (2, 30)
    b = slab_ref[:, 30:31]            # (2, 1)
    # Contract w's dim 1 with x's dim 1 -> (2, TB); batch stays on lanes.
    y = lax.dot_general(
        w, x,
        dimension_numbers=(((1,), (1,)), ((), ())),
        preferred_element_type=jnp.float32,
    )
    out_ref[...] = jnp.tanh(y + b)    # bias broadcast along lanes


# -----------------------------------------------------------------------------
# Wrapper: algebraic collapse + parameter packing + batch-tiled pallas_call.
# -----------------------------------------------------------------------------
def pack_params(params):
    """Collapse each 3-layer head to one effective weight/bias and pack both
    heads (transposed) into a single (2, 32) f32 slab."""

    def collapse(prefix):
        w1, w2, w3 = (params[f"{prefix}w{i}"] for i in (1, 2, 3))
        b1, b2, b3 = (params[f"{prefix}b{i}"] for i in (1, 2, 3))
        w_eff = w1 @ w2 @ w3                       # (30, 1)
        b_eff = b1 @ w2 @ w3 + b2 @ w3 + b3        # (1, 1)
        return w_eff[:, 0], b_eff[0, 0]

    pw, pb = collapse("p")
    vw, vb = collapse("v")
    w_t = jnp.stack([pw, vw], axis=0)              # (2, 30)
    b_t = jnp.stack([pb, vb], axis=0)[:, None]     # (2, 1)
    slab = jnp.concatenate(
        [w_t, b_t, jnp.zeros((2, 1), jnp.float32)], axis=1
    )                                              # (2, 32)
    return slab.astype(jnp.float32)


def _choose_tile(B, block_rows):
    """Pick the batch tile TB.

    Small B: one block covering the whole batch (block == array dims, so no
    (8,128)-divisibility constraint). Large B: tiles are multiples of 128
    (lane dim of the (2, TB) output block), sized so the grid has ~4+ steps
    for v7x megacore / pipeline depth, capped at block_rows.
    """
    if B <= 256:
        return B
    br = max(128, (block_rows // 128) * 128)       # multiple of 128
    quarter = -(-B // 4)                           # cdiv(B, 4)
    tb = ((quarter + 127) // 128) * 128            # round up to 128
    return min(br, tb)


def custom_network_small_forward(features, params, *, block_rows=2048):
    """features: (B, 30). Returns (policy_out, value_out), each (B, 1) f32."""
    B, F = features.shape
    assert F == 30, "feature_dim must be 30 (K*3 with K=10)"

    features = features.astype(jnp.float32)
    slab = pack_params(params)

    TB = _choose_tile(B, block_rows)
    grid = (pl.cdiv(B, TB),)

    out = pl.pallas_call(
        _fused_heads_kernel,
        out_shape=jax.ShapeDtypeStruct((2, B), jnp.float32),
        grid=grid,
        in_specs=[
            pl.BlockSpec((TB, F), lambda i: (i, 0)),     # features: tiled over batch
            pl.BlockSpec((2, 32), lambda i: (0, 0)),     # param slab: resident
        ],
        out_specs=pl.BlockSpec((2, TB), lambda i: (0, i)),  # lane-dense output
        compiler_params=pltpu.CompilerParams(
            dimension_semantics=("parallel",),           # megacore on v7x
        ),
    )(features, slab)

    return out[0].reshape(B, 1), out[1].reshape(B, 1)


# -----------------------------------------------------------------------------
# Deterministic parameter init (mimics torch.nn.Linear default: U(-1/sqrt(in),
# 1/sqrt(in)) for both weight and bias), stored transposed as (in, out).
# -----------------------------------------------------------------------------
def init_params(key):
    dims = [(30, 16), (16, 8), (8, 1)]

    def make_linear(k, din, dout):
        kw, kb = jax.random.split(k)
        bound = 1.0 / jnp.sqrt(float(din))
        w = jax.random.uniform(kw, (din, dout), jnp.float32, -bound, bound)
        b = jax.random.uniform(kb, (1, dout), jnp.float32, -bound, bound)
        return w, b

    keys = jax.random.split(key, 6)
    params = {}
    for i, (din, dout) in enumerate(dims):
        w, b = make_linear(keys[i], din, dout)
        params[f"pw{i+1}"], params[f"pb{i+1}"] = w, b
    for i, (din, dout) in enumerate(dims):
        w, b = make_linear(keys[3 + i], din, dout)
        params[f"vw{i+1}"], params[f"vb{i+1}"] = w, b
    return params


# Pure-JAX layer-by-layer reference (matches the PyTorch module exactly).
def reference_forward(features, params):
    def mlp(prefix):
        h = features
        for i in range(1, 4):
            h = h @ params[f"{prefix}w{i}"] + params[f"{prefix}b{i}"]
        return jnp.tanh(h)

    return mlp("p"), mlp("v")


if __name__ == "__main__":
    key = jax.random.PRNGKey(0)
    k_params, k_x1, k_x2 = jax.random.split(key, 3)

    params = init_params(k_params)

    # Small-batch check (single block path, block == full array dims).
    B = 8
    features = jax.random.normal(k_x1, (B, 30), dtype=jnp.float32)
    pi, vf = custom_network_small_forward(features, params)
    pi = jax.block_until_ready(pi)
    vf = jax.block_until_ready(vf)
    pi_ref, vf_ref = reference_forward(features, params)
    assert pi.shape == (B, 1) and vf.shape == (B, 1)
    assert jnp.allclose(pi, pi_ref, atol=1e-5, rtol=1e-5)
    assert jnp.allclose(vf, vf_ref, atol=1e-5, rtol=1e-5)

    # Multi-block check: exercises the tiled lane-dense grid path plus a
    # partial trailing block (272 = 2 * 128 + 16).
    B2 = 272
    features2 = jax.random.normal(k_x2, (B2, 30), dtype=jnp.float32)
    pi2, vf2 = custom_network_small_forward(features2, params, block_rows=128)
    pi2 = jax.block_until_ready(pi2)
    vf2 = jax.block_until_ready(vf2)
    pi2_ref, vf2_ref = reference_forward(features2, params)
    assert pi2.shape == (B2, 1) and vf2.shape == (B2, 1)
    assert jnp.allclose(pi2, pi2_ref, atol=1e-5, rtol=1e-5)
    assert jnp.allclose(vf2, vf2_ref, atol=1e-5, rtol=1e-5)

    print("KERNEL_OK")
</pallas_src>

<mosaic_0001>
module attributes {stable_mosaic.version = 11 : i64} {
  func.func @_fused_heads_kernel(%arg0: i32, %arg1: memref<8x30xf32, #tpu.memory_space<vmem>>, %arg2: memref<2x32xf32, #tpu.memory_space<vmem>>, %arg3: memref<2x8xf32, #tpu.memory_space<vmem>>) attributes {dimension_semantics = [#tpu.dimension_semantics<parallel>], iteration_bounds = array<i64: 1>, scalar_prefetch = 0 : i64, scratch_operands = 0 : i64, tpu.core_type = #tpu.core_type<tc>, window_params = [{transform_indices = @transform_0, window_bounds = array<i64: 8, 30>}, {pipeline_mode = #tpu.pipeline_mode<synchronous>, transform_indices = @transform_1, window_bounds = array<i64: 2, 32>}, {transform_indices = @transform_2, window_bounds = array<i64: 2, 8>}]} {
    %c0 = arith.constant 0 : index
    %c0_0 = arith.constant 0 : index
    %0 = vector.load %arg1[%c0, %c0_0] : memref<8x30xf32, #tpu.memory_space<vmem>>, vector<8x30xf32>
    %c0_1 = arith.constant 0 : index
    %c0_2 = arith.constant 0 : index
    %1 = vector.load %arg2[%c0_1, %c0_2] : memref<2x32xf32, #tpu.memory_space<vmem>>, vector<2x30xf32>
    %c0_3 = arith.constant 0 : index
    %c30 = arith.constant 30 : index
    %2 = vector.load %arg2[%c0_3, %c30] : memref<2x32xf32, #tpu.memory_space<vmem>>, vector<2x1xf32>
    %cst = arith.constant dense<0.000000e+00> : vector<2x8xf32>
    %3 = tpu.matmul %1, %0, %cst {dimension_numbers = #tpu.dot_dimension_numbers<[1], [1], [0], [0], [0, 0, 1, 0], [], []>} : vector<2x30xf32>, vector<8x30xf32>, vector<2x8xf32> -> vector<2x8xf32>
    %4 = vector.broadcast %2 : vector<2x1xf32> to vector<2x8xf32>
    %5 = arith.addf %3, %4 : vector<2x8xf32>
    %6 = math.tanh %5 : vector<2x8xf32>
    %c0_4 = arith.constant 0 : index
    %c0_5 = arith.constant 0 : index
    %7 = vector.load %arg3[%c0_4, %c0_5] : memref<2x8xf32, #tpu.memory_space<vmem>>, vector<2x8xf32>
    tpu.vector_store %arg3[%c0_4, %c0_5], %6 {strides = array<i32>} : memref<2x8xf32, #tpu.memory_space<vmem>>, vector<2x8xf32>,
    return
  }
  func.func @transform_0(%arg0: i32) -> (i32, i32) {
    %c0_i32 = arith.constant 0 : i32
    %c0_i32_0 = arith.constant 0 : i32
    return %arg0, %c0_i32 : i32, i32
  }
  func.func @transform_1(%arg0: i32) -> (i32, i32) {
    %c0_i32 = arith.constant 0 : i32
    %c0_i32_0 = arith.constant 0 : i32
    %c0_i32_1 = arith.constant 0 : i32
    return %c0_i32, %c0_i32_0 : i32, i32
  }
  func.func @transform_2(%arg0: i32) -> (i32, i32) {
    %c0_i32 = arith.constant 0 : i32
    %c0_i32_0 = arith.constant 0 : i32
    return %c0_i32, %arg0 : i32, i32
  }
}

</mosaic_0001>

<llo_original>
// kernel: tpu_custom_call.1
$region0: #{tpu_custom_call.1}
  #allocation0 [shape = 'u32[]', space=smem, size = 0x4, offset = 0x4, fixed_abs, tag = 'smem constant byte address 0x4 - core index']
  #allocation1 [shape = 'u32[144,128]{1,0:T(1,128)}', space=vmem, size = 0x12000, scoped, tag = 'internal scratch']
  %s0 = inlined_call_operand.hbm [shape: f32[8,30], index: 0, kind: input, shape index: {}]
  %s1 = inlined_call_operand.vmem [shape: f32[2,32], index: 1, kind: input, shape index: {}]
  %s2 = inlined_call_operand.hbm [shape: f32[2,8], index: 2, kind: output, shape index: {}]
  %s3 = sld [smem:[#allocation0]]
  $region22: #{tpu_custom_call.1} parent=0
    _
  %s5 = ssub.s32 1, %s3
  %s6 = scalar_select 0, %s5, %s3
  $region1: #{tpu_custom_call.1} parent=0
    #allocation2 [shape = 'u8[4096]{0}', space=vmem, size = 0x1000, scoped, tag = 'input window, operand 0, single buffered']
    #allocation3 [shape = 's32[1]{0}', space=sflag, size = 0x4, scoped, tag = 'scoped memory for tpu_custom_call.1']
    #allocation4 [shape = 's32[1]{0}', space=sflag, size = 0x4, scoped, tag = 'scoped memory for tpu_custom_call.1']
    #allocation5 [shape = 'u8[1024]{0}', space=vmem, size = 0x400, scoped, tag = 'output window, operand 0, single buffered']
    %7 = vsyncpa [#allocation3], 0
    %8 = vsyncpa [#allocation4], 0
    // Predicated region
    $region2: #{tpu_custom_call.1} parent=1 // pred_check
      _
    $region3: #{tpu_custom_call.1} parent=1 // pred_check_branch
      %10 = sbr.rel (0) target = $region5
    $region4: #{tpu_custom_call.1} parent=1 // pred_region
      %s12 = ssub.s32 128, 128
      %13 = vsyncadd [#allocation3], %s12
      %s15 = sshll.u32 [#allocation2], 4
      %s16 = int_to_ptr.vmem [resolvable:$true] %s15
      %18 = dma.hbm_to_vmem [thread:$0]  %s0, 128, %s16, [#allocation3]
    $region5: #{tpu_custom_call.1} parent=1 // pred_fallthru
      _
    // Predicated region
    $region6: #{tpu_custom_call.1} parent=1 // pred_check
      _
    $region7: #{tpu_custom_call.1} parent=1 // pred_check_branch
      %20 = sbr.rel (0) target = $region9
    $region8: #{tpu_custom_call.1} parent=1 // pred_region
      _
    $region9: #{tpu_custom_call.1} parent=1 // pred_fallthru
      _
    // Predicated region
    $region10: #{tpu_custom_call.1} parent=1 // pred_check
      _
    $region11: #{tpu_custom_call.1} parent=1 // pred_check_branch
      %22 = sbr.rel (0) target = $region13
    $region12: #{tpu_custom_call.1} parent=1 // pred_region
      %23 = dma.done [#allocation3], 128
    $region13: #{tpu_custom_call.1} parent=1 // pred_fallthru
      _
    %v24 = vld [vmem:[#allocation2] sm:$0xff]
    %v25 = vld [vmem:[%s1] sm:$0x3]
    %27 = vset.pattern.permute.xlu0 30
    %28 = vperm.xlu0 %27, %v25
    %v29 = vpop.permute.xlu0 %28
    %vm31 = vcmask 244736
    %v32 = vsel %vm31, %v25, 0
    %v35 = vsel %vm31, %v24, 0
    %37 = vmatprep.subr.mxu0 0.0
    %38 = vmatpush1.xpose.msra.mxu0 %v35
    %39 = vmatprep.subr.mxu0 0.0
    %40 = vmatpush1.xpose.msra.mxu0 0.0
    %41 = vmatprep.subr.mxu0 0.0
    %42 = vmatpush1.xpose.msra.mxu0 0.0
    %43 = vmatprep.subr.mxu0 0.0
    %44 = vmatpush1.xpose.msra.mxu0 0.0
    %45 = vmatprep.subr.mxu0 0.0
    %46 = vmatpush1.xpose.msra.mxu0 0.0
    %47 = vmatprep.subr.mxu0 0.0
    %48 = vmatpush1.xpose.msra.mxu0 0.0
    %49 = vmatprep.subr.mxu0 0.0
    %50 = vmatpush1.xpose.msra.mxu0 0.0
    %51 = vmatprep.subr.mxu0 0.0
    %52 = vmatpush1.xpose.msra.mxu0 0.0
    %53 = vmatprep.subr.mxu0 0.0
    %54 = vmatpush1.xpose.msra.mxu0 0.0
    %55 = vmatprep.subr.mxu0 0.0
    %56 = vmatpush1.xpose.msra.mxu0 0.0
    %57 = vmatprep.subr.mxu0 0.0
    %58 = vmatpush1.xpose.msra.mxu0 0.0
    %59 = vmatprep.subr.mxu0 0.0
    %60 = vmatpush1.xpose.msra.mxu0 0.0
    %61 = vmatprep.subr.mxu0 0.0
    %62 = vmatpush1.xpose.msra.mxu0 0.0
    %63 = vmatprep.subr.mxu0 0.0
    %64 = vmatpush1.xpose.msra.mxu0 0.0
    %65 = vmatprep.subr.mxu0 0.0
    %66 = vmatpush1.xpose.msra.mxu0 0.0
    %67 = vmatprep.subr.mxu0 0.0
    %68 = vmatpush1.xpose.msra.mxu0 0.0
    %69 = vmatprep.subr.mxu0 0.0
    %70 = vmatpush1.xpose.msra.mxu0 0.0
    %71 = vmatprep.subr.mxu0 0.0
    %72 = vmatpush1.xpose.msra.mxu0 0.0
    %73 = vmatprep.subr.mxu0 0.0
    %74 = vmatpush1.xpose.msra.mxu0 0.0
    %75 = vmatprep.subr.mxu0 0.0
    %76 = vmatpush1.xpose.msra.mxu0 0.0
    %77 = vmatprep.subr.mxu0 0.0
    %78 = vmatpush1.xpose.msra.mxu0 0.0
    %79 = vmatprep.subr.mxu0 0.0
    %80 = vmatpush1.xpose.msra.mxu0 0.0
    %81 = vmatprep.subr.mxu0 0.0
    %82 = vmatpush1.xpose.msra.mxu0 0.0
    %83 = vmatprep.subr.mxu0 0.0
    %84 = vmatpush1.xpose.msra.mxu0 0.0
    %85 = vmatprep.subr.mxu0 0.0
    %86 = vmatpush1.xpose.msra.mxu0 0.0
    %87 = vmatprep.subr.mxu0 0.0
    %88 = vmatpush1.xpose.msra.mxu0 0.0
    %89 = vmatprep.subr.mxu0 0.0
    %90 = vmatpush1.xpose.msra.mxu0 0.0
    %91 = vmatprep.subr.mxu0 0.0
    %92 = vmatpush1.xpose.msra.mxu0 0.0
    %93 = vmatprep.subr.mxu0 0.0
    %94 = vmatpush1.xpose.msra.mxu0 0.0
    %95 = vmatprep.subr.mxu0 0.0
    %96 = vmatpush1.xpose.msra.mxu0 0.0
    %97 = vmatprep.subr.mxu0 0.0
    %98 = vmatpush1.xpose.msra.mxu0 0.0
    %99 = vmatprep.subr.mxu0 0.0
    %100 = vmatpush1.xpose.msra.mxu0 0.0
    %101 = vmatprep.mubr.f32.mxu0 0.0
    %102 = vmatmul.mubr.f32.gmra.mrb[0].mxu0 %v32
    %v103 = vpop.f32.mrb[0].mxu0
    %v104 = vadd.f32 %v29, %v103
    %v105 = vpop.f32.mrb[0].mxu0
    %106 = vdwg.mxu0
    %v107 = vtanh.pop %v104
    %vm108 = vcmask 58368
    %109 = vst.msk [vmem:[#allocation5] sm:$0x3] %vm108, %v107
    // Predicated region
    $region14: #{tpu_custom_call.1} parent=1 // pred_check
      _
    $region15: #{tpu_custom_call.1} parent=1 // pred_check_branch
      %111 = sbr.rel (0) target = $region17
    $region16: #{tpu_custom_call.1} parent=1 // pred_region
      %s113 = ssub.s32 32, 32
      %114 = vsyncadd [#allocation4], %s113
      %s116 = sshll.u32 [#allocation5], 4
      %s117 = int_to_ptr.vmem [resolvable:$true] %s116
      %119 = dma.vmem_to_hbm [thread:$0]  %s117, 32, %s2, [#allocation4]
    $region17: #{tpu_custom_call.1} parent=1 // pred_fallthru
      _
    // Predicated region
    $region18: #{tpu_custom_call.1} parent=1 // pred_check
      _
    $region19: #{tpu_custom_call.1} parent=1 // pred_check_branch
      %121 = sbr.rel (0) target = $region21
    $region20: #{tpu_custom_call.1} parent=1 // pred_region
      %122 = dma.done [#allocation4], 32
    $region21: #{tpu_custom_call.1} parent=1 // pred_fallthru
      _
    %123 = vsyncpa [#allocation3], 1
    %124 = vsyncpa [#allocation4], 1

</llo_original>
